<compile_context>
chip_gen: v6e
topology: v6e:2x2x1
jax: 0.10.0
libtpu: 0.0.40
codegen_flags: <defaults>
</compile_context>

<pallas_src>
import functools

import jax
import jax.numpy as jnp
from jax.experimental import pallas as pl
from jax.experimental.pallas import tpu as pltpu

_LANE = 128
# Padded-footprint budgets (bytes) for one block of one buffered array.
_FUSED_BLOCK_BYTES = 2 << 20   # fused fwd+loss: in + out double-buffered
_LOSS_BLOCK_BYTES = 8 << 20    # loss-only: pure read reduction, go bigger


def _round_up(x, m):
    return (x + m - 1) // m * m


def _sublane_multiple(itemsize):
    # f32 sublane tile = 8; sub-32-bit dtypes pack along sublanes.
    return 8 * max(1, 4 // int(itemsize))


def _padded_block_bytes(bb, c, sblk, itemsize):
    c_pad = _round_up(c, _sublane_multiple(itemsize))
    return bb * c_pad * sblk * int(itemsize)


def _vmem_limit_bytes(needed):
    # Generous headroom, but stay under v7x's 64 MiB physical VMEM.
    return int(min(max(2 * needed + (4 << 20), 16 << 20), 56 << 20))


def _choose_tiles(B, C, HW_pad, itemsize, max_padded_block_bytes):
    """Pick (batch_block, spatial_block); sizes by the *padded* footprint."""
    c_pad = _round_up(C, _sublane_multiple(itemsize))
    row_bytes = c_pad * int(itemsize)
    max_sblk = max(_LANE, (max_padded_block_bytes // row_bytes) // _LANE * _LANE)
    sblk = _LANE
    for cand in range(HW_pad, 0, -_LANE):        # HW_pad is a multiple of 128
        if cand <= max_sblk and HW_pad % cand == 0:
            sblk = cand
            break
    bb = max(1, min(B, max_padded_block_bytes // (c_pad * sblk * int(itemsize))))
    while B % bb:
        bb -= 1
    # Prefer >= 2 batch blocks so the "parallel" batch axis can feed both v7x
    # TensorCores (neutral on v5e/v6e; blocks stay well above the ~512-elem
    # lane plateau for real shapes).
    if B >= 2 and B // bb < 2:
        for d in range(B // 2, 0, -1):
            if B % d == 0:
                bb = d
                break
    return bb, sblk


# ---------------------------------------------------------------------------
# Fused forward (1x1 channel mix) + physics-loss-partials kernel
# ---------------------------------------------------------------------------
def _fused_forward_loss_kernel(x_ref, w_ref, b_ref,             # inputs
                               o_ref, mass_ref, sq_ref,         # outputs
                               samp_acc, sq_acc,                 # scratch
                               *, inv_n, hw_valid, sblk, needs_mask):
    sj = pl.program_id(1)
    last_s = pl.num_programs(1) - 1

    @pl.when(sj == 0)
    def _init():
        samp_acc[...] = jnp.zeros_like(samp_acc)
        sq_acc[...] = jnp.zeros_like(sq_acc)

    x = x_ref[...].astype(jnp.float32)                  # (BB, C, SBLK)
    n_ch = x.shape[1]

    # 1x1-conv channel mix, unrolled on the VPU (C is tiny; the MXU would run
    # a padded tile at <4% utilization).  HW axis stays lane-dense.
    ys = []
    for o in range(n_ch):
        acc = w_ref[o, 0] * x[:, 0, :]
        for c in range(1, n_ch):
            acc = acc + w_ref[o, c] * x[:, c, :]
        ys.append(acc + b_ref[0, o])                    # (BB, SBLK)

    # Single full-block store (stack once) instead of C masked channel stores.
    o_ref[...] = jnp.stack(ys, axis=1).astype(o_ref.dtype)

    # Vector-form loss accumulators: only elementwise VPU adds per grid step;
    # cross-lane reductions are deferred to the finalize block below.
    y_sum = ys[0]
    y_sq = ys[0] * ys[0]
    for o in range(1, n_ch):
        y_sum = y_sum + ys[o]
        y_sq = y_sq + ys[o] * ys[o]
    if needs_mask:
        pos = jax.lax.broadcasted_iota(jnp.int32, (1, sblk), 1) + sj * sblk
        valid = (pos < hw_valid).astype(jnp.float32)
        y_sum = y_sum * valid
        y_sq = y_sq * valid
    samp_acc[...] = samp_acc[...] + y_sum
    sq_acc[...] = sq_acc[...] + y_sq

    @pl.when(sj == last_s)
    def _finalize():
        # Per-batch-block partials; the cross-block combine is done in JAX so
        # the batch grid axis can stay "parallel".
        s = jnp.sum(samp_acc[...], axis=1, keepdims=True) * inv_n   # (BB, 1)
        mass_ref[...] = jnp.sum(s * s, axis=0, keepdims=True).reshape(1, 1, 1)
        sq_row = jnp.sum(sq_acc[...], axis=1, keepdims=True)        # (BB, 1)
        sq_ref[...] = jnp.sum(sq_row, axis=0, keepdims=True).reshape(1, 1, 1)


def forward_and_physics_loss(x_nchw, weight, bias, weights=None, pred_dtype=None):
    """x: (B,C,H,W); weight: (C,C); bias: (C,) -> (pred, scalar physics loss)."""
    if weights is None:
        weights = {"mass": 1.0, "energy": 1.0}
    B, C, H, W = x_nchw.shape
    HW = H * W
    N = C * HW
    HW_pad = _round_up(HW, _LANE)
    x3 = x_nchw.reshape(B, C, HW)
    if HW_pad != HW:
        x3 = jnp.pad(x3, ((0, 0), (0, 0), (0, HW_pad - HW)))
    out_dtype = x3.dtype if pred_dtype is None else jnp.dtype(pred_dtype)

    itemsize = max(x3.dtype.itemsize, jnp.dtype(out_dtype).itemsize)
    BB, SBLK = _choose_tiles(B, C, HW_pad, itemsize, _FUSED_BLOCK_BYTES)
    NB = B // BB
    grid = (NB, HW_pad // SBLK)

    w2 = weight.astype(jnp.float32)
    b2 = bias.reshape(1, C).astype(jnp.float32)
    smem = pltpu.MemorySpace.SMEM

    kernel = functools.partial(
        _fused_forward_loss_kernel,
        inv_n=1.0 / float(N), hw_valid=HW, sblk=SBLK,
        needs_mask=(HW_pad != HW))

    in_blk = _padded_block_bytes(BB, C, SBLK, x3.dtype.itemsize)
    out_blk = _padded_block_bytes(BB, C, SBLK, jnp.dtype(out_dtype).itemsize)
    scratch_bytes = 2 * _round_up(BB, 8) * SBLK * 4
    vmem_needed = 2 * (in_blk + out_blk) + scratch_bytes

    cost = pl.CostEstimate(
        flops=2 * B * C * C * HW + 4 * B * C * HW,
        transcendentals=0,
        bytes_accessed=x3.size * x3.dtype.itemsize
        + B * C * HW_pad * jnp.dtype(out_dtype).itemsize)

    pred3, mass_parts, sq_parts = pl.pallas_call(
        kernel,
        out_shape=(jax.ShapeDtypeStruct((B, C, HW_pad), out_dtype),
                   jax.ShapeDtypeStruct((NB, 1, 1), jnp.float32),
                   jax.ShapeDtypeStruct((NB, 1, 1), jnp.float32)),
        grid=grid,
        in_specs=[
            pl.BlockSpec((BB, C, SBLK), lambda i, j: (i, 0, j)),
            pl.BlockSpec((C, C), lambda i, j: (0, 0), memory_space=smem),
            pl.BlockSpec((1, C), lambda i, j: (0, 0), memory_space=smem),
        ],
        out_specs=(
            pl.BlockSpec((BB, C, SBLK), lambda i, j: (i, 0, j)),
            pl.BlockSpec((1, 1, 1), lambda i, j: (i, 0, 0)),
            pl.BlockSpec((1, 1, 1), lambda i, j: (i, 0, 0)),
        ),
        scratch_shapes=[
            pltpu.VMEM((BB, SBLK), jnp.float32),   # per-sample running sums
            pltpu.VMEM((BB, SBLK), jnp.float32),   # running sum of squares
        ],
        compiler_params=pltpu.CompilerParams(
            dimension_semantics=("parallel", "arbitrary"),
            vmem_limit_bytes=_vmem_limit_bytes(vmem_needed)),
        cost_estimate=cost,
    )(x3, w2, b2)

    # Tiny cross-block combine (and loss weighting) in plain JAX.
    mass = jnp.sum(mass_parts) / B
    energy = jnp.sum(sq_parts) / (B * float(N))
    loss = (jnp.float32(weights.get("mass", 1.0)) * mass
            + jnp.float32(weights.get("energy", 1.0)) * energy)

    if HW_pad != HW:
        pred3 = pred3[:, :, :HW]
    return pred3.reshape(B, C, H, W), loss


# ---------------------------------------------------------------------------
# Pred-only forward kernel (no loss partials on the critical path)
# ---------------------------------------------------------------------------
def _forward_kernel(x_ref, w_ref, b_ref, o_ref):
    x = x_ref[...].astype(jnp.float32)                  # (BB, C, SBLK)
    n_ch = x.shape[1]
    ys = []
    for o in range(n_ch):
        acc = w_ref[o, 0] * x[:, 0, :]
        for c in range(1, n_ch):
            acc = acc + w_ref[o, c] * x[:, c, :]
        ys.append(acc + b_ref[0, o])
    o_ref[...] = jnp.stack(ys, axis=1).astype(o_ref.dtype)


def forward(x_nchw, weight, bias, pred_dtype=None):
    """Module `forward` (pred only)."""
    B, C, H, W = x_nchw.shape
    HW = H * W
    HW_pad = _round_up(HW, _LANE)
    x3 = x_nchw.reshape(B, C, HW)
    if HW_pad != HW:
        x3 = jnp.pad(x3, ((0, 0), (0, 0), (0, HW_pad - HW)))
    out_dtype = x3.dtype if pred_dtype is None else jnp.dtype(pred_dtype)

    itemsize = max(x3.dtype.itemsize, jnp.dtype(out_dtype).itemsize)
    BB, SBLK = _choose_tiles(B, C, HW_pad, itemsize, _FUSED_BLOCK_BYTES)
    grid = (B // BB, HW_pad // SBLK)

    w2 = weight.astype(jnp.float32)
    b2 = bias.reshape(1, C).astype(jnp.float32)
    smem = pltpu.MemorySpace.SMEM

    in_blk = _padded_block_bytes(BB, C, SBLK, x3.dtype.itemsize)
    out_blk = _padded_block_bytes(BB, C, SBLK, jnp.dtype(out_dtype).itemsize)
    vmem_needed = 2 * (in_blk + out_blk)

    cost = pl.CostEstimate(
        flops=2 * B * C * C * HW, transcendentals=0,
        bytes_accessed=x3.size * x3.dtype.itemsize
        + B * C * HW_pad * jnp.dtype(out_dtype).itemsize)

    pred3 = pl.pallas_call(
        _forward_kernel,
        out_shape=jax.ShapeDtypeStruct((B, C, HW_pad), out_dtype),
        grid=grid,
        in_specs=[
            pl.BlockSpec((BB, C, SBLK), lambda i, j: (i, 0, j)),
            pl.BlockSpec((C, C), lambda i, j: (0, 0), memory_space=smem),
            pl.BlockSpec((1, C), lambda i, j: (0, 0), memory_space=smem),
        ],
        out_specs=pl.BlockSpec((BB, C, SBLK), lambda i, j: (i, 0, j)),
        compiler_params=pltpu.CompilerParams(
            dimension_semantics=("parallel", "parallel"),
            vmem_limit_bytes=_vmem_limit_bytes(vmem_needed)),
        cost_estimate=cost,
    )(x3, w2, b2)

    if HW_pad != HW:
        pred3 = pred3[:, :, :HW]
    return pred3.reshape(B, C, H, W)


# ---------------------------------------------------------------------------
# Standalone physics-loss kernel (module API parity), pure read reduction
# ---------------------------------------------------------------------------
def _physics_loss_kernel(p_ref, mass_ref, sq_ref, samp_acc, sq_acc,
                         *, inv_n, hw_valid, sblk, needs_mask):
    sj = pl.program_id(1)
    last_s = pl.num_programs(1) - 1

    @pl.when(sj == 0)
    def _init():
        samp_acc[...] = jnp.zeros_like(samp_acc)
        sq_acc[...] = jnp.zeros_like(sq_acc)

    y = p_ref[...].astype(jnp.float32)                  # (BB, C, SBLK)
    n_ch = y.shape[1]
    y_sum = y[:, 0, :]
    y_sq = y[:, 0, :] * y[:, 0, :]
    for c in range(1, n_ch):
        y_sum = y_sum + y[:, c, :]
        y_sq = y_sq + y[:, c, :] * y[:, c, :]
    if needs_mask:
        pos = jax.lax.broadcasted_iota(jnp.int32, (1, sblk), 1) + sj * sblk
        valid = (pos < hw_valid).astype(jnp.float32)
        y_sum = y_sum * valid
        y_sq = y_sq * valid
    samp_acc[...] = samp_acc[...] + y_sum
    sq_acc[...] = sq_acc[...] + y_sq

    @pl.when(sj == last_s)
    def _finalize():
        s = jnp.sum(samp_acc[...], axis=1, keepdims=True) * inv_n
        mass_ref[...] = jnp.sum(s * s, axis=0, keepdims=True).reshape(1, 1, 1)
        sq_row = jnp.sum(sq_acc[...], axis=1, keepdims=True)
        sq_ref[...] = jnp.sum(sq_row, axis=0, keepdims=True).reshape(1, 1, 1)


def compute_physics_loss(pred, target=None, weights=None):
    """pred: (B,C,H,W) -> scalar float32 physics loss (target unused).

    Note: reads the stored pred; if pred was emitted in a lower precision the
    fused path (which reduces the f32 mix) can differ slightly.
    """
    if weights is None:
        weights = {"mass": 1.0, "energy": 1.0}
    B, C, H, W = pred.shape
    HW = H * W
    N = C * HW
    HW_pad = _round_up(HW, _LANE)
    p3 = pred.reshape(B, C, HW)
    if HW_pad != HW:
        p3 = jnp.pad(p3, ((0, 0), (0, 0), (0, HW_pad - HW)))

    BB, SBLK = _choose_tiles(B, C, HW_pad, p3.dtype.itemsize, _LOSS_BLOCK_BYTES)
    NB = B // BB
    grid = (NB, HW_pad // SBLK)

    kernel = functools.partial(
        _physics_loss_kernel,
        inv_n=1.0 / float(N), hw_valid=HW, sblk=SBLK,
        needs_mask=(HW_pad != HW))

    in_blk = _padded_block_bytes(BB, C, SBLK, p3.dtype.itemsize)
    scratch_bytes = 2 * _round_up(BB, 8) * SBLK * 4
    vmem_needed = 2 * in_blk + scratch_bytes

    cost = pl.CostEstimate(
        flops=4 * B * C * HW, transcendentals=0,
        bytes_accessed=p3.size * p3.dtype.itemsize)

    mass_parts, sq_parts = pl.pallas_call(
        kernel,
        out_shape=(jax.ShapeDtypeStruct((NB, 1, 1), jnp.float32),
                   jax.ShapeDtypeStruct((NB, 1, 1), jnp.float32)),
        grid=grid,
        in_specs=[pl.BlockSpec((BB, C, SBLK), lambda i, j: (i, 0, j))],
        out_specs=(
            pl.BlockSpec((1, 1, 1), lambda i, j: (i, 0, 0)),
            pl.BlockSpec((1, 1, 1), lambda i, j: (i, 0, 0)),
        ),
        scratch_shapes=[
            pltpu.VMEM((BB, SBLK), jnp.float32),
            pltpu.VMEM((BB, SBLK), jnp.float32),
        ],
        compiler_params=pltpu.CompilerParams(
            dimension_semantics=("parallel", "arbitrary"),
            vmem_limit_bytes=_vmem_limit_bytes(vmem_needed)),
        cost_estimate=cost,
    )(p3)

    mass = jnp.sum(mass_parts) / B
    energy = jnp.sum(sq_parts) / (B * float(N))
    return (jnp.float32(weights.get("mass", 1.0)) * mass
            + jnp.float32(weights.get("energy", 1.0)) * energy)


# ---------------------------------------------------------------------------
# Pure-JAX references (correctness check)
# ---------------------------------------------------------------------------
def _forward_ref(x, weight, bias):
    return jnp.einsum("oc,bchw->bohw", weight, x) + bias[None, :, None, None]


def _loss_ref(pred, w_mass=1.0, w_energy=1.0):
    B = pred.shape[0]
    flat = pred.reshape(B, -1)
    mass = jnp.mean(jnp.mean(flat, axis=1) ** 2)
    energy = jnp.mean(flat ** 2)
    return w_mass * mass + w_energy * energy


# ---------------------------------------------------------------------------
if __name__ == "__main__":
    key = jax.random.PRNGKey(0)
    kx, kw, kb = jax.random.split(key, 3)

    B, C, H, W = 2, 4, 16, 16
    x = jax.random.normal(kx, (B, C, H, W), dtype=jnp.float32)

    # Deterministic synthetic parameters for the concrete forward (1x1 conv).
    weight = jnp.eye(C, dtype=jnp.float32) + 0.1 * jax.random.normal(
        kw, (C, C), dtype=jnp.float32)
    bias = 0.01 * jax.random.normal(kb, (C,), dtype=jnp.float32)

    # Fused forward + physics loss: one pallas_call, pred never re-read from HBM.
    pred, loss = forward_and_physics_loss(
        x, weight, bias, weights={"mass": 1.0, "energy": 1.0})
    pred = jax.block_until_ready(pred)
    loss = jax.block_until_ready(loss)

    # Pred-only forward path (no loss partials in-kernel).
    pred_only = jax.block_until_ready(forward(x, weight, bias))

    # Standalone loss kernel (module API parity) on the Pallas pred.
    loss_standalone = jax.block_until_ready(compute_physics_loss(pred))
    loss_weighted = jax.block_until_ready(
        compute_physics_loss(pred, weights={"mass": 2.0, "energy": 0.5}))

    # Correctness checks against pure-JAX references.
    pred_ref = _forward_ref(x, weight, bias)
    loss_ref = _loss_ref(pred_ref)
    loss_w_ref = _loss_ref(pred_ref, 2.0, 0.5)
    assert jnp.allclose(pred, pred_ref, atol=1e-4, rtol=1e-4), "fused forward mismatch"
    assert jnp.allclose(pred_only, pred_ref, atol=1e-4, rtol=1e-4), "forward mismatch"
    assert jnp.allclose(loss, loss_ref, atol=1e-5, rtol=1e-4), "fused loss mismatch"
    assert jnp.allclose(loss_standalone, loss_ref, atol=1e-5, rtol=1e-4), (
        "standalone loss mismatch")
    assert jnp.allclose(loss_weighted, loss_w_ref, atol=1e-5, rtol=1e-4), (
        "weighted loss mismatch")

    print("KERNEL_OK")
</pallas_src>

<mosaic_0001>
module attributes {stable_mosaic.version = 11 : i64} {
  func.func @_fused_forward_loss_kernel(%arg0: i32, %arg1: i32, %arg2: memref<1x4x256xf32, #tpu.memory_space<vmem>>, %arg3: memref<4x4xf32, #tpu.memory_space<smem>>, %arg4: memref<1x4xf32, #tpu.memory_space<smem>>, %arg5: memref<1x4x256xf32, #tpu.memory_space<vmem>>, %arg6: memref<1x1x1xf32, #tpu.memory_space<vmem>>, %arg7: memref<1x1x1xf32, #tpu.memory_space<vmem>>, %arg8: memref<1x256xf32, #tpu.memory_space<vmem>>, %arg9: memref<1x256xf32, #tpu.memory_space<vmem>>) attributes {dimension_semantics = [#tpu.dimension_semantics<parallel>, #tpu.dimension_semantics<arbitrary>], iteration_bounds = array<i64: 2, 1>, scalar_prefetch = 0 : i64, scratch_operands = 2 : i64, tpu.core_type = #tpu.core_type<tc>, window_params = [{transform_indices = @transform_0, window_bounds = array<i64: 1, 4, 256>}, {transform_indices = @transform_1, window_bounds = array<i64: 4, 4>}, {transform_indices = @transform_2, window_bounds = array<i64: 1, 4>}, {transform_indices = @transform_3, window_bounds = array<i64: 1, 4, 256>}, {transform_indices = @transform_4, window_bounds = array<i64: 1, 1, 1>}, {transform_indices = @transform_5, window_bounds = array<i64: 1, 1, 1>}]} {
    %c0_i32 = arith.constant 0 : i32
    %0 = arith.cmpi eq, %arg1, %c0_i32 : i32
    %1 = arith.extui %0 : i1 to i32
    %c0_i32_0 = arith.constant 0 : i32
    %2 = arith.cmpi ne, %1, %c0_i32_0 : i32
    scf.if %2 {
      %cst = arith.constant 0.000000e+00 : f32
      %133 = vector.broadcast %cst : f32 to vector<1x256xf32>
      %c0_53 = arith.constant 0 : index
      %c0_54 = arith.constant 0 : index
      %134 = vector.load %arg8[%c0_53, %c0_54] : memref<1x256xf32, #tpu.memory_space<vmem>>, vector<1x256xf32>
      tpu.vector_store %arg8[%c0_53, %c0_54], %133 {strides = array<i32>} : memref<1x256xf32, #tpu.memory_space<vmem>>, vector<1x256xf32>,
      %cst_55 = arith.constant 0.000000e+00 : f32
      %135 = vector.broadcast %cst_55 : f32 to vector<1x256xf32>
      %c0_56 = arith.constant 0 : index
      %c0_57 = arith.constant 0 : index
      %136 = vector.load %arg9[%c0_56, %c0_57] : memref<1x256xf32, #tpu.memory_space<vmem>>, vector<1x256xf32>
      tpu.vector_store %arg9[%c0_56, %c0_57], %135 {strides = array<i32>} : memref<1x256xf32, #tpu.memory_space<vmem>>, vector<1x256xf32>,
    } else {
    }
    %c0 = arith.constant 0 : index
    %c0_1 = arith.constant 0 : index
    %c0_2 = arith.constant 0 : index
    %3 = vector.load %arg2[%c0, %c0_1, %c0_2] : memref<1x4x256xf32, #tpu.memory_space<vmem>>, vector<1x4x256xf32>
    %c0_3 = arith.constant 0 : index
    %c0_4 = arith.constant 0 : index
    %4 = memref.load %arg3[%c0_3, %c0_4] : memref<4x4xf32, #tpu.memory_space<smem>>
    %5 = vector.extract_strided_slice %3 {offsets = [0, 0, 0], sizes = [1, 1, 256], strides = [1, 1, 1]} : vector<1x4x256xf32> to vector<1x1x256xf32>
    %6 = vector.shape_cast %5 : vector<1x1x256xf32> to vector<1x256xf32>
    %7 = vector.broadcast %4 : f32 to vector<1x256xf32>
    %8 = arith.mulf %7, %6 : vector<1x256xf32>
    %c0_5 = arith.constant 0 : index
    %c1 = arith.constant 1 : index
    %9 = memref.load %arg3[%c0_5, %c1] : memref<4x4xf32, #tpu.memory_space<smem>>
    %10 = vector.extract_strided_slice %3 {offsets = [0, 1, 0], sizes = [1, 1, 256], strides = [1, 1, 1]} : vector<1x4x256xf32> to vector<1x1x256xf32>
    %11 = vector.shape_cast %10 : vector<1x1x256xf32> to vector<1x256xf32>
    %12 = vector.broadcast %9 : f32 to vector<1x256xf32>
    %13 = arith.mulf %12, %11 : vector<1x256xf32>
    %14 = arith.addf %8, %13 : vector<1x256xf32>
    %c0_6 = arith.constant 0 : index
    %c2 = arith.constant 2 : index
    %15 = memref.load %arg3[%c0_6, %c2] : memref<4x4xf32, #tpu.memory_space<smem>>
    %16 = vector.extract_strided_slice %3 {offsets = [0, 2, 0], sizes = [1, 1, 256], strides = [1, 1, 1]} : vector<1x4x256xf32> to vector<1x1x256xf32>
    %17 = vector.shape_cast %16 : vector<1x1x256xf32> to vector<1x256xf32>
    %18 = vector.broadcast %15 : f32 to vector<1x256xf32>
    %19 = arith.mulf %18, %17 : vector<1x256xf32>
    %20 = arith.addf %14, %19 : vector<1x256xf32>
    %c0_7 = arith.constant 0 : index
    %c3 = arith.constant 3 : index
    %21 = memref.load %arg3[%c0_7, %c3] : memref<4x4xf32, #tpu.memory_space<smem>>
    %22 = vector.extract_strided_slice %3 {offsets = [0, 3, 0], sizes = [1, 1, 256], strides = [1, 1, 1]} : vector<1x4x256xf32> to vector<1x1x256xf32>
    %23 = vector.shape_cast %22 : vector<1x1x256xf32> to vector<1x256xf32>
    %24 = vector.broadcast %21 : f32 to vector<1x256xf32>
    %25 = arith.mulf %24, %23 : vector<1x256xf32>
    %26 = arith.addf %20, %25 : vector<1x256xf32>
    %c0_8 = arith.constant 0 : index
    %c0_9 = arith.constant 0 : index
    %27 = memref.load %arg4[%c0_8, %c0_9] : memref<1x4xf32, #tpu.memory_space<smem>>
    %28 = vector.broadcast %27 : f32 to vector<1x256xf32>
    %29 = arith.addf %26, %28 : vector<1x256xf32>
    %c1_10 = arith.constant 1 : index
    %c0_11 = arith.constant 0 : index
    %30 = memref.load %arg3[%c1_10, %c0_11] : memref<4x4xf32, #tpu.memory_space<smem>>
    %31 = vector.extract_strided_slice %3 {offsets = [0, 0, 0], sizes = [1, 1, 256], strides = [1, 1, 1]} : vector<1x4x256xf32> to vector<1x1x256xf32>
    %32 = vector.shape_cast %31 : vector<1x1x256xf32> to vector<1x256xf32>
    %33 = vector.broadcast %30 : f32 to vector<1x256xf32>
    %34 = arith.mulf %33, %32 : vector<1x256xf32>
    %c1_12 = arith.constant 1 : index
    %c1_13 = arith.constant 1 : index
    %35 = memref.load %arg3[%c1_12, %c1_13] : memref<4x4xf32, #tpu.memory_space<smem>>
    %36 = vector.extract_strided_slice %3 {offsets = [0, 1, 0], sizes = [1, 1, 256], strides = [1, 1, 1]} : vector<1x4x256xf32> to vector<1x1x256xf32>
    %37 = vector.shape_cast %36 : vector<1x1x256xf32> to vector<1x256xf32>
    %38 = vector.broadcast %35 : f32 to vector<1x256xf32>
    %39 = arith.mulf %38, %37 : vector<1x256xf32>
    %40 = arith.addf %34, %39 : vector<1x256xf32>
    %c1_14 = arith.constant 1 : index
    %c2_15 = arith.constant 2 : index
    %41 = memref.load %arg3[%c1_14, %c2_15] : memref<4x4xf32, #tpu.memory_space<smem>>
    %42 = vector.extract_strided_slice %3 {offsets = [0, 2, 0], sizes = [1, 1, 256], strides = [1, 1, 1]} : vector<1x4x256xf32> to vector<1x1x256xf32>
    %43 = vector.shape_cast %42 : vector<1x1x256xf32> to vector<1x256xf32>
    %44 = vector.broadcast %41 : f32 to vector<1x256xf32>
    %45 = arith.mulf %44, %43 : vector<1x256xf32>
    %46 = arith.addf %40, %45 : vector<1x256xf32>
    %c1_16 = arith.constant 1 : index
    %c3_17 = arith.constant 3 : index
    %47 = memref.load %arg3[%c1_16, %c3_17] : memref<4x4xf32, #tpu.memory_space<smem>>
    %48 = vector.extract_strided_slice %3 {offsets = [0, 3, 0], sizes = [1, 1, 256], strides = [1, 1, 1]} : vector<1x4x256xf32> to vector<1x1x256xf32>
    %49 = vector.shape_cast %48 : vector<1x1x256xf32> to vector<1x256xf32>
    %50 = vector.broadcast %47 : f32 to vector<1x256xf32>
    %51 = arith.mulf %50, %49 : vector<1x256xf32>
    %52 = arith.addf %46, %51 : vector<1x256xf32>
    %c0_18 = arith.constant 0 : index
    %c1_19 = arith.constant 1 : index
    %53 = memref.load %arg4[%c0_18, %c1_19] : memref<1x4xf32, #tpu.memory_space<smem>>
    %54 = vector.broadcast %53 : f32 to vector<1x256xf32>
    %55 = arith.addf %52, %54 : vector<1x256xf32>
    %c2_20 = arith.constant 2 : index
    %c0_21 = arith.constant 0 : index
    %56 = memref.load %arg3[%c2_20, %c0_21] : memref<4x4xf32, #tpu.memory_space<smem>>
    %57 = vector.extract_strided_slice %3 {offsets = [0, 0, 0], sizes = [1, 1, 256], strides = [1, 1, 1]} : vector<1x4x256xf32> to vector<1x1x256xf32>
    %58 = vector.shape_cast %57 : vector<1x1x256xf32> to vector<1x256xf32>
    %59 = vector.broadcast %56 : f32 to vector<1x256xf32>
    %60 = arith.mulf %59, %58 : vector<1x256xf32>
    %c2_22 = arith.constant 2 : index
    %c1_23 = arith.constant 1 : index
    %61 = memref.load %arg3[%c2_22, %c1_23] : memref<4x4xf32, #tpu.memory_space<smem>>
    %62 = vector.extract_strided_slice %3 {offsets = [0, 1, 0], sizes = [1, 1, 256], strides = [1, 1, 1]} : vector<1x4x256xf32> to vector<1x1x256xf32>
    %63 = vector.shape_cast %62 : vector<1x1x256xf32> to vector<1x256xf32>
    %64 = vector.broadcast %61 : f32 to vector<1x256xf32>
    %65 = arith.mulf %64, %63 : vector<1x256xf32>
    %66 = arith.addf %60, %65 : vector<1x256xf32>
    %c2_24 = arith.constant 2 : index
    %c2_25 = arith.constant 2 : index
    %67 = memref.load %arg3[%c2_24, %c2_25] : memref<4x4xf32, #tpu.memory_space<smem>>
    %68 = vector.extract_strided_slice %3 {offsets = [0, 2, 0], sizes = [1, 1, 256], strides = [1, 1, 1]} : vector<1x4x256xf32> to vector<1x1x256xf32>
    %69 = vector.shape_cast %68 : vector<1x1x256xf32> to vector<1x256xf32>
    %70 = vector.broadcast %67 : f32 to vector<1x256xf32>
    %71 = arith.mulf %70, %69 : vector<1x256xf32>
    %72 = arith.addf %66, %71 : vector<1x256xf32>
    %c2_26 = arith.constant 2 : index
    %c3_27 = arith.constant 3 : index
    %73 = memref.load %arg3[%c2_26, %c3_27] : memref<4x4xf32, #tpu.memory_space<smem>>
    %74 = vector.extract_strided_slice %3 {offsets = [0, 3, 0], sizes = [1, 1, 256], strides = [1, 1, 1]} : vector<1x4x256xf32> to vector<1x1x256xf32>
    %75 = vector.shape_cast %74 : vector<1x1x256xf32> to vector<1x256xf32>
    %76 = vector.broadcast %73 : f32 to vector<1x256xf32>
    %77 = arith.mulf %76, %75 : vector<1x256xf32>
    %78 = arith.addf %72, %77 : vector<1x256xf32>
    %c0_28 = arith.constant 0 : index
    %c2_29 = arith.constant 2 : index
    %79 = memref.load %arg4[%c0_28, %c2_29] : memref<1x4xf32, #tpu.memory_space<smem>>
    %80 = vector.broadcast %79 : f32 to vector<1x256xf32>
    %81 = arith.addf %78, %80 : vector<1x256xf32>
    %c3_30 = arith.constant 3 : index
    %c0_31 = arith.constant 0 : index
    %82 = memref.load %arg3[%c3_30, %c0_31] : memref<4x4xf32, #tpu.memory_space<smem>>
    %83 = vector.extract_strided_slice %3 {offsets = [0, 0, 0], sizes = [1, 1, 256], strides = [1, 1, 1]} : vector<1x4x256xf32> to vector<1x1x256xf32>
    %84 = vector.shape_cast %83 : vector<1x1x256xf32> to vector<1x256xf32>
    %85 = vector.broadcast %82 : f32 to vector<1x256xf32>
    %86 = arith.mulf %85, %84 : vector<1x256xf32>
    %c3_32 = arith.constant 3 : index
    %c1_33 = arith.constant 1 : index
    %87 = memref.load %arg3[%c3_32, %c1_33] : memref<4x4xf32, #tpu.memory_space<smem>>
    %88 = vector.extract_strided_slice %3 {offsets = [0, 1, 0], sizes = [1, 1, 256], strides = [1, 1, 1]} : vector<1x4x256xf32> to vector<1x1x256xf32>
    %89 = vector.shape_cast %88 : vector<1x1x256xf32> to vector<1x256xf32>
    %90 = vector.broadcast %87 : f32 to vector<1x256xf32>
    %91 = arith.mulf %90, %89 : vector<1x256xf32>
    %92 = arith.addf %86, %91 : vector<1x256xf32>
    %c3_34 = arith.constant 3 : index
    %c2_35 = arith.constant 2 : index
    %93 = memref.load %arg3[%c3_34, %c2_35] : memref<4x4xf32, #tpu.memory_space<smem>>
    %94 = vector.extract_strided_slice %3 {offsets = [0, 2, 0], sizes = [1, 1, 256], strides = [1, 1, 1]} : vector<1x4x256xf32> to vector<1x1x256xf32>
    %95 = vector.shape_cast %94 : vector<1x1x256xf32> to vector<1x256xf32>
    %96 = vector.broadcast %93 : f32 to vector<1x256xf32>
    %97 = arith.mulf %96, %95 : vector<1x256xf32>
    %98 = arith.addf %92, %97 : vector<1x256xf32>
    %c3_36 = arith.constant 3 : index
    %c3_37 = arith.constant 3 : index
    %99 = memref.load %arg3[%c3_36, %c3_37] : memref<4x4xf32, #tpu.memory_space<smem>>
    %100 = vector.extract_strided_slice %3 {offsets = [0, 3, 0], sizes = [1, 1, 256], strides = [1, 1, 1]} : vector<1x4x256xf32> to vector<1x1x256xf32>
    %101 = vector.shape_cast %100 : vector<1x1x256xf32> to vector<1x256xf32>
    %102 = vector.broadcast %99 : f32 to vector<1x256xf32>
    %103 = arith.mulf %102, %101 : vector<1x256xf32>
    %104 = arith.addf %98, %103 : vector<1x256xf32>
    %c0_38 = arith.constant 0 : index
    %c3_39 = arith.constant 3 : index
    %105 = memref.load %arg4[%c0_38, %c3_39] : memref<1x4xf32, #tpu.memory_space<smem>>
    %106 = vector.broadcast %105 : f32 to vector<1x256xf32>
    %107 = arith.addf %104, %106 : vector<1x256xf32>
    %108 = vector.shape_cast %29 : vector<1x256xf32> to vector<1x1x256xf32>
    %109 = vector.shape_cast %55 : vector<1x256xf32> to vector<1x1x256xf32>
    %110 = vector.shape_cast %81 : vector<1x256xf32> to vector<1x1x256xf32>
    %111 = vector.shape_cast %107 : vector<1x256xf32> to vector<1x1x256xf32>
    %112 = tpu.concatenate %108, %109, %110, %111 in 1 : vector<1x1x256xf32>, vector<1x1x256xf32>, vector<1x1x256xf32>, vector<1x1x256xf32> -> vector<1x4x256xf32>
    %c0_40 = arith.constant 0 : index
    %c0_41 = arith.constant 0 : index
    %c0_42 = arith.constant 0 : index
    %113 = vector.load %arg5[%c0_40, %c0_41, %c0_42] : memref<1x4x256xf32, #tpu.memory_space<vmem>>, vector<1x4x256xf32>
    tpu.vector_store %arg5[%c0_40, %c0_41, %c0_42], %112 {strides = array<i32>} : memref<1x4x256xf32, #tpu.memory_space<vmem>>, vector<1x4x256xf32>,
    %114 = arith.mulf %29, %29 : vector<1x256xf32>
    %115 = arith.addf %29, %55 : vector<1x256xf32>
    %116 = arith.mulf %55, %55 : vector<1x256xf32>
    %117 = arith.addf %114, %116 : vector<1x256xf32>
    %118 = arith.addf %115, %81 : vector<1x256xf32>
    %119 = arith.mulf %81, %81 : vector<1x256xf32>
    %120 = arith.addf %117, %119 : vector<1x256xf32>
    %121 = arith.addf %118, %107 : vector<1x256xf32>
    %122 = arith.mulf %107, %107 : vector<1x256xf32>
    %123 = arith.addf %120, %122 : vector<1x256xf32>
    %c0_43 = arith.constant 0 : index
    %c0_44 = arith.constant 0 : index
    %124 = vector.load %arg8[%c0_43, %c0_44] : memref<1x256xf32, #tpu.memory_space<vmem>>, vector<1x256xf32>
    %125 = arith.addf %124, %121 : vector<1x256xf32>
    %c0_45 = arith.constant 0 : index
    %c0_46 = arith.constant 0 : index
    %126 = vector.load %arg8[%c0_45, %c0_46] : memref<1x256xf32, #tpu.memory_space<vmem>>, vector<1x256xf32>
    tpu.vector_store %arg8[%c0_45, %c0_46], %125 {strides = array<i32>} : memref<1x256xf32, #tpu.memory_space<vmem>>, vector<1x256xf32>,
    %c0_47 = arith.constant 0 : index
    %c0_48 = arith.constant 0 : index
    %127 = vector.load %arg9[%c0_47, %c0_48] : memref<1x256xf32, #tpu.memory_space<vmem>>, vector<1x256xf32>
    %128 = arith.addf %127, %123 : vector<1x256xf32>
    %c0_49 = arith.constant 0 : index
    %c0_50 = arith.constant 0 : index
    %129 = vector.load %arg9[%c0_49, %c0_50] : memref<1x256xf32, #tpu.memory_space<vmem>>, vector<1x256xf32>
    tpu.vector_store %arg9[%c0_49, %c0_50], %128 {strides = array<i32>} : memref<1x256xf32, #tpu.memory_space<vmem>>, vector<1x256xf32>,
    %c0_i32_51 = arith.constant 0 : i32
    %130 = arith.cmpi eq, %arg1, %c0_i32_51 : i32
    %131 = arith.extui %130 : i1 to i32
    %c0_i32_52 = arith.constant 0 : i32
    %132 = arith.cmpi ne, %131, %c0_i32_52 : i32
    scf.if %132 {
      %c0_53 = arith.constant 0 : index
      %c0_54 = arith.constant 0 : index
      %133 = vector.load %arg8[%c0_53, %c0_54] : memref<1x256xf32, #tpu.memory_space<vmem>>, vector<1x256xf32>
      %cst = arith.constant dense<0.000000e+00> : vector<1xf32>
      %134 = vector.multi_reduction <add>, %133, %cst [1] : vector<1x256xf32> to vector<1xf32>
      %135 = vector.shape_cast %134 : vector<1xf32> to vector<1x1xf32>
      %cst_55 = arith.constant 9.765625E-4 : f32
      %136 = vector.broadcast %cst_55 : f32 to vector<1x1xf32>
      %137 = arith.mulf %135, %136 : vector<1x1xf32>
      %138 = arith.mulf %137, %137 : vector<1x1xf32>
      %cst_56 = arith.constant dense<0.000000e+00> : vector<1xf32>
      %139 = vector.multi_reduction <add>, %138, %cst_56 [0] : vector<1x1xf32> to vector<1xf32>
      %140 = vector.shape_cast %139 : vector<1xf32> to vector<1x1xf32>
      %141 = vector.shape_cast %140 : vector<1x1xf32> to vector<1x1x1xf32>
      %c0_57 = arith.constant 0 : index
      %c0_58 = arith.constant 0 : index
      %c0_59 = arith.constant 0 : index
      %142 = vector.load %arg6[%c0_57, %c0_58, %c0_59] : memref<1x1x1xf32, #tpu.memory_space<vmem>>, vector<1x1x1xf32>
      tpu.vector_store %arg6[%c0_57, %c0_58, %c0_59], %141 {strides = array<i32>} : memref<1x1x1xf32, #tpu.memory_space<vmem>>, vector<1x1x1xf32>,
      %c0_60 = arith.constant 0 : index
      %c0_61 = arith.constant 0 : index
      %143 = vector.load %arg9[%c0_60, %c0_61] : memref<1x256xf32, #tpu.memory_space<vmem>>, vector<1x256xf32>
      %cst_62 = arith.constant dense<0.000000e+00> : vector<1xf32>
      %144 = vector.multi_reduction <add>, %143, %cst_62 [1] : vector<1x256xf32> to vector<1xf32>
      %145 = vector.shape_cast %144 : vector<1xf32> to vector<1x1xf32>
      %cst_63 = arith.constant dense<0.000000e+00> : vector<1xf32>
      %146 = vector.multi_reduction <add>, %145, %cst_63 [0] : vector<1x1xf32> to vector<1xf32>
      %147 = vector.shape_cast %146 : vector<1xf32> to vector<1x1xf32>
      %148 = vector.shape_cast %147 : vector<1x1xf32> to vector<1x1x1xf32>
      %c0_64 = arith.constant 0 : index
      %c0_65 = arith.constant 0 : index
      %c0_66 = arith.constant 0 : index
      %149 = vector.load %arg7[%c0_64, %c0_65, %c0_66] : memref<1x1x1xf32, #tpu.memory_space<vmem>>, vector<1x1x1xf32>
      tpu.vector_store %arg7[%c0_64, %c0_65, %c0_66], %148 {strides = array<i32>} : memref<1x1x1xf32, #tpu.memory_space<vmem>>, vector<1x1x1xf32>,
    } else {
    }
    return
  }
  func.func @transform_0(%arg0: i32, %arg1: i32) -> (i32, i32, i32) {
    %c0_i32 = arith.constant 0 : i32
    %c0_i32_0 = arith.constant 0 : i32
    return %arg0, %c0_i32, %arg1 : i32, i32, i32
  }
  func.func @transform_1(%arg0: i32, %arg1: i32) -> (i32, i32) {
    %c0_i32 = arith.constant 0 : i32
    %c0_i32_0 = arith.constant 0 : i32
    %c0_i32_1 = arith.constant 0 : i32
    return %c0_i32, %c0_i32_0 : i32, i32
  }
  func.func @transform_2(%arg0: i32, %arg1: i32) -> (i32, i32) {
    %c0_i32 = arith.constant 0 : i32
    %c0_i32_0 = arith.constant 0 : i32
    %c0_i32_1 = arith.constant 0 : i32
    return %c0_i32, %c0_i32_0 : i32, i32
  }
  func.func @transform_3(%arg0: i32, %arg1: i32) -> (i32, i32, i32) {
    %c0_i32 = arith.constant 0 : i32
    %c0_i32_0 = arith.constant 0 : i32
    return %arg0, %c0_i32, %arg1 : i32, i32, i32
  }
  func.func @transform_4(%arg0: i32, %arg1: i32) -> (i32, i32, i32) {
    %c0_i32 = arith.constant 0 : i32
    %c0_i32_0 = arith.constant 0 : i32
    %c0_i32_1 = arith.constant 0 : i32
    return %arg0, %c0_i32, %c0_i32_0 : i32, i32, i32
  }
  func.func @transform_5(%arg0: i32, %arg1: i32) -> (i32, i32, i32) {
    %c0_i32 = arith.constant 0 : i32
    %c0_i32_0 = arith.constant 0 : i32
    %c0_i32_1 = arith.constant 0 : i32
    return %arg0, %c0_i32, %c0_i32_0 : i32, i32, i32
  }
}

</mosaic_0001>

<llo_original>
// kernel: tpu_custom_call.1
$region0: #{tpu_custom_call.1}
  #allocation0 [shape = 'u32[]', space=smem, size = 0x4, offset = 0x4, fixed_abs, tag = 'smem constant byte address 0x4 - core index']
  #allocation1 [shape = 'u32[144,128]{1,0:T(1,128)}', space=vmem, size = 0x12000, scoped, tag = 'internal scratch']
  #allocation2 [shape = 'f32[1,256]{1,0:T(1,128)}', space=vmem, size = 0x400, scoped, tag = 'scratch operand']
  #allocation3 [shape = 'f32[1,256]{1,0:T(1,128)}', space=vmem, size = 0x400, scoped, tag = 'scratch operand']
  %s0 = inlined_call_operand.hbm [shape: f32[2,4,256], index: 0, kind: input, shape index: {}]
  %s1 = inlined_call_operand.hbm [shape: f32[4,4], index: 1, kind: input, shape index: {}]
  %s2 = inlined_call_operand.vmem [shape: f32[1,4], index: 2, kind: input, shape index: {}]
  %s3 = inlined_call_operand.hbm [shape: f32[2,4,256], index: 3, kind: output, shape index: {0}]
  %s4 = inlined_call_operand.vmem [shape: f32[2,1,1], index: 4, kind: output, shape index: {1}]
  %s5 = inlined_call_operand.vmem [shape: f32[2,1,1], index: 5, kind: output, shape index: {2}]
  %6 = xla_tuple %s3, %s4, %s5
  %s7 = sld [smem:[#allocation0]]
  $region81: #{tpu_custom_call.1} parent=0
    _
  %s9 = ssub.s32 1, %s7
  %s10 = scalar_select 0, %s9, %s7
  $region1: #{tpu_custom_call.1} parent=0
    #allocation4 [shape = 'u8[8192]{0}', space=vmem, size = 0x2000, scoped, tag = 'input window, operand 0']
    #allocation5 [shape = 's32[2]{0}', space=sflag, size = 0x8, scoped, tag = 'scoped memory for tpu_custom_call.1']
    #allocation6 [shape = 's32[2]{0}', space=sflag, size = 0x8, scoped, tag = 'scoped memory for tpu_custom_call.1']
    #allocation7 [shape = 's32[2]{0}', space=sflag, size = 0x8, scoped, tag = 'scoped memory for tpu_custom_call.1']
    #allocation8 [shape = 's32[2]{0}', space=sflag, size = 0x8, scoped, tag = 'scoped memory for tpu_custom_call.1']
    #allocation9 [shape = 'u8[2048]{0}', space=smem, size = 0x800, scoped, tag = 'input window, operand 1, single buffered']
    #allocation10 [shape = 'u8[512]{0}', space=smem, size = 0x200, scoped, tag = 'input window, operand 2, single buffered']
    #allocation11 [shape = 'u8[8192]{0}', space=vmem, size = 0x2000, scoped, tag = 'output window, operand 0']
    %11 = vsyncpa [#allocation5], 0
    %s12 = scalar_lea.sflag [#allocation5], 1
    %13 = vsyncpa %s12, 0
    %14 = vsyncpa [#allocation7], 0
    %15 = vsyncpa [#allocation8], 0
    %16 = vsyncpa [#allocation6], 0
    %s17 = scalar_lea.sflag [#allocation6], 1
    %18 = vsyncpa %s17, 0
    loop: start=0, step=1, limit=4
    $region2: #{tpu_custom_call.1} parent=1 // loop_pre_header
      _
    $region3: #{tpu_custom_call.1} parent=1 // loop_header
      %s20 = sphi 0, %s24
      %p21 = scmp.ge.s32.totalorder %s20, 4
      %s27 = sphi 0, %s39
      %s28 = sphi 0, %s35
      %s29 = sphi 0, %s27
      %s30 = sphi 0, %s28
      %s31 = sphi 0, %s29
      %s32 = sphi 0, %s30
      %s44 = sphi 0, %s46
      %s47 = sphi 0, %s44
      %s48 = sphi 0, %s47
      %s64 = sphi 0, %s48
      %s68 = sphi 0, %s68
      %s70 = sphi 0, %s68
      %s71 = sphi 0, %s70
      %s85 = sphi 0, %s71
      %s89 = sphi 0, %s89
      %s91 = sphi 0, %s89
      %s92 = sphi 0, %s91
      %s106 = sphi 0, %s92
      %s114 = sphi 0, %s116
      %s117 = sphi 0, %s114
      %s118 = sphi 0, %s117
      %s134 = sphi 0, %s118
      %s140 = sphi 0, %s142
      %s143 = sphi 0, %s140
      %s144 = sphi 0, %s143
      %s160 = sphi 0, %s144
      %s166 = sphi 0, %s168
      %s169 = sphi 0, %s166
      %s170 = sphi 0, %s169
      %s186 = sphi 0, %s170
    $region4: #{tpu_custom_call.1} parent=1 // loop_header_branch
      %23 = sbr.rel (%p21) target = $region8
    $region5: #{tpu_custom_call.1} parent=1 // loop_body
      %s25 = ssub.s32 %s20, 1
      %s26 = ssub.s32 %s20, 2
      %s33 = sadd.s32 1, %s28
      %p34 = scmp.ge.s32.totalorder %s33, 1
      %s35 = scalar_select %p34, 0, %s33
      %s36 = sadd.s32 1, %s27
      %s37 = scalar_select %p34, %s36, %s27
      %p38 = scmp.ge.s32.totalorder %s37, 2
      %s39 = scalar_select %p38, 0, %s37
      %s40 = ssub.s32 %s27, %s39
      %s41 = ssub.s32 %s28, %s35
      %s42 = sor.u32 %s40, %s41
      %p43 = scmp.eq.s32.totalorder %s42, 0
      %s45 = sadd.s32 %s44, 1
      %s46 = scalar_select %p43, %s44, %s45
      %p49 = pneg %p43
      %p50 = scmp.eq.s32.totalorder %s20, 1
      %p51 = por %p49, %p50
      %p52 = scmp.ne.s32.totalorder %s44, %s47
      %p53 = scmp.eq.s32.totalorder %s20, 0
      %p54 = por %p52, %p53
      %p55 = scmp.ne.s32.totalorder %s44, %s47
      %p56 = scmp.eq.s32.totalorder %s25, 1
      %p57 = por %p55, %p56
      %p58 = scmp.ne.s32.totalorder %s47, %s48
      %p59 = scmp.eq.s32.totalorder %s25, 0
      %p60 = por %p58, %p59
      %p61 = scmp.ne.s32.totalorder %s47, %s48
      %p62 = scmp.eq.s32.totalorder %s26, 1
      %p63 = por %p61, %p62
      %p65 = scmp.ne.s32.totalorder %s48, %s64
      %p66 = scmp.eq.s32.totalorder %s26, 0
      %p67 = por %p65, %p66
      %s69 = sadd.s32 %s68, 1
      %p72 = scmp.eq.s32.totalorder %s20, 1
      %p73 = scmp.ne.s32.totalorder %s68, %s70
      %p74 = scmp.eq.s32.totalorder %s20, 0
      %p75 = por %p73, %p74
      %p76 = scmp.ne.s32.totalorder %s68, %s70
      %p77 = scmp.eq.s32.totalorder %s25, 1
      %p78 = por %p76, %p77
      %p79 = scmp.ne.s32.totalorder %s70, %s71
      %p80 = scmp.eq.s32.totalorder %s25, 0
      %p81 = por %p79, %p80
      %p82 = scmp.ne.s32.totalorder %s70, %s71
      %p83 = scmp.eq.s32.totalorder %s26, 1
      %p84 = por %p82, %p83
      %p86 = scmp.ne.s32.totalorder %s71, %s85
      %p87 = scmp.eq.s32.totalorder %s26, 0
      %p88 = por %p86, %p87
      %s90 = sadd.s32 %s89, 1
      %p93 = scmp.eq.s32.totalorder %s20, 1
      %p94 = scmp.ne.s32.totalorder %s89, %s91
      %p95 = scmp.eq.s32.totalorder %s20, 0
      %p96 = por %p94, %p95
      %p97 = scmp.ne.s32.totalorder %s89, %s91
      %p98 = scmp.eq.s32.totalorder %s25, 1
      %p99 = por %p97, %p98
      %p100 = scmp.ne.s32.totalorder %s91, %s92
      %p101 = scmp.eq.s32.totalorder %s25, 0
      %p102 = por %p100, %p101
      %p103 = scmp.ne.s32.totalorder %s91, %s92
      %p104 = scmp.eq.s32.totalorder %s26, 1
      %p105 = por %p103, %p104
      %p107 = scmp.ne.s32.totalorder %s92, %s106
      %p108 = scmp.eq.s32.totalorder %s26, 0
      %p109 = por %p107, %p108
      %s110 = ssub.s32 %s27, %s39
      %s111 = ssub.s32 %s28, %s35
      %s112 = sor.u32 %s110, %s111
      %p113 = scmp.eq.s32.totalorder %s112, 0
      %s115 = sadd.s32 %s114, 1
      %s116 = scalar_select %p113, %s114, %s115
      %p119 = pneg %p113
      %p120 = scmp.eq.s32.totalorder %s20, 1
      %p121 = por %p119, %p120
      %p122 = scmp.ne.s32.totalorder %s114, %s117
      %p123 = scmp.eq.s32.totalorder %s20, 0
      %p124 = por %p122, %p123
      %p125 = scmp.ne.s32.totalorder %s114, %s117
      %p126 = scmp.eq.s32.totalorder %s25, 1
      %p127 = por %p125, %p126
      %p128 = scmp.ne.s32.totalorder %s117, %s118
      %p129 = scmp.eq.s32.totalorder %s25, 0
      %p130 = por %p128, %p129
      %p131 = scmp.ne.s32.totalorder %s117, %s118
      %p132 = scmp.eq.s32.totalorder %s26, 1
      %p133 = por %p131, %p132
      %p135 = scmp.ne.s32.totalorder %s118, %s134
      %p136 = scmp.eq.s32.totalorder %s26, 0
      %p137 = por %p135, %p136
      %s138 = ssub.s32 %s27, %s39
      %p139 = scmp.eq.s32.totalorder %s138, 0
      %s141 = sadd.s32 %s140, 1
      %s142 = scalar_select %p139, %s140, %s141
      %p145 = pneg %p139
      %p146 = scmp.eq.s32.totalorder %s20, 1
      %p147 = por %p145, %p146
      %p148 = scmp.ne.s32.totalorder %s140, %s143
      %p149 = scmp.eq.s32.totalorder %s20, 0
      %p150 = por %p148, %p149
      %p151 = scmp.ne.s32.totalorder %s140, %s143
      %p152 = scmp.eq.s32.totalorder %s25, 1
      %p153 = por %p151, %p152
      %p154 = scmp.ne.s32.totalorder %s143, %s144
      %p155 = scmp.eq.s32.totalorder %s25, 0
      %p156 = por %p154, %p155
      %p157 = scmp.ne.s32.totalorder %s143, %s144
      %p158 = scmp.eq.s32.totalorder %s26, 1
      %p159 = por %p157, %p158
      %p161 = scmp.ne.s32.totalorder %s144, %s160
      %p162 = scmp.eq.s32.totalorder %s26, 0
      %p163 = por %p161, %p162
      %s164 = ssub.s32 %s27, %s39
      %p165 = scmp.eq.s32.totalorder %s164, 0
      %s167 = sadd.s32 %s166, 1
      %s168 = scalar_select %p165, %s166, %s167
      %p171 = pneg %p165
      %p172 = scmp.eq.s32.totalorder %s20, 1
      %p173 = por %p171, %p172
      %p174 = scmp.ne.s32.totalorder %s166, %s169
      %p175 = scmp.eq.s32.totalorder %s20, 0
      %p176 = por %p174, %p175
      %p177 = scmp.ne.s32.totalorder %s166, %s169
      %p178 = scmp.eq.s32.totalorder %s25, 1
      %p179 = por %p177, %p178
      %p180 = scmp.ne.s32.totalorder %s169, %s170
      %p181 = scmp.eq.s32.totalorder %s25, 0
      %p182 = por %p180, %p181
      %p183 = scmp.ne.s32.totalorder %s169, %s170
      %p184 = scmp.eq.s32.totalorder %s26, 1
      %p185 = por %p183, %p184
      %p187 = scmp.ne.s32.totalorder %s170, %s186
      %p188 = scmp.eq.s32.totalorder %s26, 0
      %p189 = por %p187, %p188
      %p190 = scmp.le.s32.totalorder 1, %s20
      %p191 = scmp.lt.s32.totalorder %s20, 3
      %p192 = pnand %p190, %p191
      %p193 = pneg %p192
      // Predicated region
      $region9: #{tpu_custom_call.1} parent=5 // pred_check
        _
      $region10: #{tpu_custom_call.1} parent=5 // pred_check_branch
        %195 = sbr.rel (%p192) target = $region12
      $region11: #{tpu_custom_call.1} parent=5 // pred_region
        %s196 = ssub.s32 %s20, 1
        // Predicated region
        $region13: #{tpu_custom_call.1} parent=11 // pred_check
          %p197 = pneg %p81
        $region14: #{tpu_custom_call.1} parent=11 // pred_check_branch
          %199 = sbr.rel (%p197) target = $region16
        $region15: #{tpu_custom_call.1} parent=11 // pred_region
          %s201 = ssub.s32 64, 64
          %202 = vsyncadd [#allocation7], %s201
          %205 = dma.hbm_to_smem %s1, 64, [#allocation9], [#allocation7]
        $region16: #{tpu_custom_call.1} parent=11 // pred_fallthru
          _
        // Predicated region
        $region17: #{tpu_custom_call.1} parent=11 // pred_check
          %p206 = pneg %p102
        $region18: #{tpu_custom_call.1} parent=11 // pred_check_branch
          %208 = sbr.rel (%p206) target = $region20
        $region19: #{tpu_custom_call.1} parent=11 // pred_region
          %s210 = ssub.s32 16, 16
          %211 = vsyncadd [#allocation8], %s210
          %s213 = sshll.u32 %s2, 4
          %s214 = int_to_ptr.vmem [resolvable:$true] %s213
          %216 = dma.vmem_to_smem %s214, 16, [#allocation10], [#allocation8]
        $region20: #{tpu_custom_call.1} parent=11 // pred_fallthru
          _
      $region12: #{tpu_custom_call.1} parent=5 // pred_fallthru
        _
      %p217 = scmp.lt.s32.totalorder %s20, 2
      // Predicated region
      $region21: #{tpu_custom_call.1} parent=5 // pred_check
        %p218 = pneg %p217
      $region22: #{tpu_custom_call.1} parent=5 // pred_check_branch
        %220 = sbr.rel (%p218) target = $region24
      $region23: #{tpu_custom_call.1} parent=5 // pred_region
        // Predicated region
        $region25: #{tpu_custom_call.1} parent=23 // pred_check
          %p221 = pneg %p54
        $region26: #{tpu_custom_call.1} parent=23 // pred_check_branch
          %223 = sbr.rel (%p221) target = $region28
        $region27: #{tpu_custom_call.1} parent=23 // pred_region
          %s224 = sand.u32 %s44, 1
          %s225 = scalar_lea.sflag [#allocation5], %s224
          %s226 = sand.u32 %s44, 1
          %s227 = smul.addr %s226, 8
          %s228 = scalar_lea.vmem [#allocation4], %s227
          %s229 = smul.u32 2, %s28
          %s231 = ssub.s32 128, 128
          %232 = vsyncadd %s225, %s231
          %s233 = smul.addr %s27, 2
          %s234 = sadd.s32 %s229, %s233
          %s235 = smul.addr %s234, 64
          %s236 = scalar_lea.hbm %s0, %s235
          %s238 = sshll.u32 %s228, 4
          %s239 = int_to_ptr.vmem [resolvable:$true] %s238
          %241 = dma.hbm_to_vmem [thread:$0]  %s236, 128, %s239, %s225
        $region28: #{tpu_custom_call.1} parent=23 // pred_fallthru
          _
      $region24: #{tpu_custom_call.1} parent=5 // pred_fallthru
        _
      %p242 = scmp.le.s32.totalorder 1, %s20
      %p243 = scmp.lt.s32.totalorder %s20, 3
      %p244 = pnand %p242, %p243
      %p245 = pneg %p244
      // Predicated region
      $region29: #{tpu_custom_call.1} parent=5 // pred_check
        _
      $region30: #{tpu_custom_call.1} parent=5 // pred_check_branch
        %247 = sbr.rel (%p244) target = $region32
      $region31: #{tpu_custom_call.1} parent=5 // pred_region
        %s248 = ssub.s32 %s20, 1
        %s249 = sand.u32 %s47, 1
        %s250 = scalar_lea.sflag [#allocation5], %s249
        %s251 = sand.u32 %s47, 1
        %s252 = smul.addr %s251, 8
        %s253 = scalar_lea.vmem [#allocation4], %s252
        // Predicated region
        $region33: #{tpu_custom_call.1} parent=31 // pred_check
          %p254 = pneg %p60
        $region34: #{tpu_custom_call.1} parent=31 // pred_check_branch
          %256 = sbr.rel (%p254) target = $region36
        $region35: #{tpu_custom_call.1} parent=31 // pred_region
          %257 = dma.done %s250, 128
        $region36: #{tpu_custom_call.1} parent=31 // pred_fallthru
          _
        // Predicated region
        $region37: #{tpu_custom_call.1} parent=31 // pred_check
          %p258 = pneg %p81
        $region38: #{tpu_custom_call.1} parent=31 // pred_check_branch
          %260 = sbr.rel (%p258) target = $region40
        $region39: #{tpu_custom_call.1} parent=31 // pred_region
          %261 = dma.done [#allocation7], 64
        $region40: #{tpu_custom_call.1} parent=31 // pred_fallthru
          _
        // Predicated region
        $region41: #{tpu_custom_call.1} parent=31 // pred_check
          %p262 = pneg %p102
        $region42: #{tpu_custom_call.1} parent=31 // pred_check_branch
          %264 = sbr.rel (%p262) target = $region44
        $region43: #{tpu_custom_call.1} parent=31 // pred_region
          %265 = dma.done [#allocation8], 16
        $region44: #{tpu_custom_call.1} parent=31 // pred_fallthru
          _
        %266 = sfence
        %s267 = sand.u32 %s47, 1
        %s268 = scalar_lea.sflag [#allocation5], %s267
        %s269 = sand.u32 %s47, 1
        %s270 = smul.addr %s269, 8
        %s271 = scalar_lea.vmem [#allocation4], %s270
        %p272 = pneg %p60
        %p273 = pneg %p57
        %p274 = pneg %p81
        %p275 = pneg %p78
        %p276 = pneg %p102
        %p277 = pneg %p99
        %p278 = pneg %p130
        %p279 = pneg %p127
        %s280 = sand.u32 %s117, 1
        %s281 = scalar_lea.sflag [#allocation6], %s280
        %s282 = sand.u32 %s117, 1
        %s283 = smul.addr %s282, 8
        %s284 = scalar_lea.vmem [#allocation11], %s283
        %p285 = pneg %p156
        %p286 = pneg %p153
        %p287 = scmp.lt.s32.totalorder %s29, 1
        %s288 = scalar_select %p287, %s29, 1
        %s289 = scalar_lea.vmem %s4, %s288
        %p290 = pneg %p182
        %p291 = pneg %p179
        %p292 = scmp.lt.s32.totalorder %s29, 1
        %s293 = scalar_select %p292, %s29, 1
        %s294 = scalar_lea.vmem %s5, %s293
        %s295 = smul.u32 2, %s30
        %s296 = smul.u32 2, %s30
        %p297 = scmp.lt.s32.totalorder %s29, 1
        %s298 = scalar_select %p297, %s29, 1
        %s299 = scalar_lea.vmem %s4, %s298
        %p300 = scmp.lt.s32.totalorder %s29, 1
        %s301 = scalar_select %p300, %s29, 1
        %s302 = scalar_lea.vmem %s5, %s301
        %p303 = scmp.eq.s32.totalorder %s30, 0
        // Predicated region
        $region45: #{tpu_custom_call.1} parent=31 // pred_check
          %p304 = pneg %p303
        $region46: #{tpu_custom_call.1} parent=31 // pred_check_branch
          %306 = sbr.rel (%p304) target = $region48
        $region47: #{tpu_custom_call.1} parent=31 // pred_region
          %v307 = vlaneseq
          %vm308 = vcmp.ge.s32.totalorder %v307, 0
          %vm309 = vcmp.lt.s32.totalorder %v307, 256
          %vm310 = vmand %vm308, %vm309
          %311 = vst.msk [vmem:[#allocation2] sm:$0x3] %vm310, 0.0
          %312 = vst.msk [vmem:[#allocation3] sm:$0x3] %vm310, 0.0
        $region48: #{tpu_custom_call.1} parent=31 // pred_fallthru
          _
        %v313 = vld [vmem:[%s253] sm:$0xff]
        %s314 = sld [smem:[#allocation9]]
        %v315 = vstv %s314
        %v316 = vmul.f32 %v315, %v313
        %s317 = sld [smem:[#allocation9 + $0x1]]
        %v318 = vstv %s317
        %v319 = vmul.f32 %v318, %v313
        %v321 = vrot.slane %v319, 5
        %v322 = vrot.slane %v321, 4
        %v324 = vadd.f32 %v316, %v322
        %s325 = sld [smem:[#allocation9 + $0x2]]
        %v326 = vstv %s325
        %v327 = vmul.f32 %v326, %v313
        %v329 = vrot.slane %v327, 6
        %v330 = vrot.slane %v329, 4
        %v332 = vadd.f32 %v324, %v330
        %s333 = sld [smem:[#allocation9 + $0x3]]
        %v334 = vstv %s333
        %v335 = vmul.f32 %v334, %v313
        %v337 = vrot.slane %v335, 7
        %v338 = vrot.slane %v337, 4
        %v340 = vadd.f32 %v332, %v338
        %s341 = sld [smem:[#allocation10]]
        %v342 = vstv %s341
        %v343 = vadd.f32 %v340, %v342
        %s344 = sld [smem:[#allocation9 + $0x80]]
        %v345 = vstv %s344
        %v346 = vmul.f32 %v345, %v313
        %s347 = sld [smem:[#allocation9 + $0x81]]
        %v348 = vstv %s347
        %v349 = vmul.f32 %v348, %v313
        %v351 = vrot.slane %v349, 5
        %v352 = vrot.slane %v351, 4
        %v354 = vadd.f32 %v346, %v352
        %s355 = sld [smem:[#allocation9 + $0x82]]
        %v356 = vstv %s355
        %v357 = vmul.f32 %v356, %v313
        %v359 = vrot.slane %v357, 6
        %v360 = vrot.slane %v359, 4
        %v362 = vadd.f32 %v354, %v360
        %s363 = sld [smem:[#allocation9 + $0x83]]
        %v364 = vstv %s363
        %v365 = vmul.f32 %v364, %v313
        %v367 = vrot.slane %v365, 7
        %v368 = vrot.slane %v367, 4
        %v370 = vadd.f32 %v362, %v368
        %s371 = sld [smem:[#allocation10 + $0x1]]
        %v372 = vstv %s371
        %v373 = vadd.f32 %v370, %v372
        %s374 = sld [smem:[#allocation9 + $0x100]]
        %v375 = vstv %s374
        %v376 = vmul.f32 %v375, %v313
        %s377 = sld [smem:[#allocation9 + $0x101]]
        %v378 = vstv %s377
        %v379 = vmul.f32 %v378, %v313
        %v381 = vrot.slane %v379, 5
        %v382 = vrot.slane %v381, 4
        %v384 = vadd.f32 %v376, %v382
        %s385 = sld [smem:[#allocation9 + $0x102]]
        %v386 = vstv %s385
        %v387 = vmul.f32 %v386, %v313
        %v389 = vrot.slane %v387, 6
        %v390 = vrot.slane %v389, 4
        %v392 = vadd.f32 %v384, %v390
        %s393 = sld [smem:[#allocation9 + $0x103]]
        %v394 = vstv %s393
        %v395 = vmul.f32 %v394, %v313
        %v397 = vrot.slane %v395, 7
        %v398 = vrot.slane %v397, 4
        %v400 = vadd.f32 %v392, %v398
        %s401 = sld [smem:[#allocation10 + $0x2]]
        %v402 = vstv %s401
        %v403 = vadd.f32 %v400, %v402
        %s404 = sld [smem:[#allocation9 + $0x180]]
        %v405 = vstv %s404
        %v406 = vmul.f32 %v405, %v313
        %s407 = sld [smem:[#allocation9 + $0x181]]
        %v408 = vstv %s407
        %v409 = vmul.f32 %v408, %v313
        %v411 = vrot.slane %v409, 5
        %v412 = vrot.slane %v411, 4
        %v414 = vadd.f32 %v406, %v412
        %s415 = sld [smem:[#allocation9 + $0x182]]
        %v416 = vstv %s415
        %v417 = vmul.f32 %v416, %v313
        %v419 = vrot.slane %v417, 6
        %v420 = vrot.slane %v419, 4
        %v422 = vadd.f32 %v414, %v420
        %s423 = sld [smem:[#allocation9 + $0x183]]
        %v424 = vstv %s423
        %v425 = vmul.f32 %v424, %v313
        %v427 = vrot.slane %v425, 7
        %v428 = vrot.slane %v427, 4
        %v430 = vadd.f32 %v422, %v428
        %s431 = sld [smem:[#allocation10 + $0x3]]
        %v432 = vstv %s431
        %v433 = vadd.f32 %v430, %v432
        %v435 = vlaneseq
        %v436 = vshrl.u32 %v435, 7
        %v437 = vsub.s32 0, %v436
        %v438 = vrot.slane %v343, %v437
        %v439 = vlaneseq
        %v440 = vshrl.u32 %v439, 7
        %v441 = vsub.s32 4, %v440
        %v442 = vrot.slane %v343, %v441
        %v446 = vlaneseq
        %v447 = vshrl.u32 %v446, 7
        %v448 = vsub.s32 0, %v447
        %v449 = vrot.slane %v373, %v448
        %v450 = vlaneseq
        %v451 = vshrl.u32 %v450, 7
        %v452 = vsub.s32 4, %v451
        %v453 = vrot.slane %v373, %v452
        %v457 = vlaneseq
        %v458 = vshrl.u32 %v457, 7
        %v459 = vsub.s32 0, %v458
        %v460 = vrot.slane %v403, %v459
        %v461 = vlaneseq
        %v462 = vshrl.u32 %v461, 7
        %v463 = vsub.s32 4, %v462
        %v464 = vrot.slane %v403, %v463
        %v468 = vlaneseq
        %v469 = vshrl.u32 %v468, 7
        %v470 = vsub.s32 0, %v469
        %v471 = vrot.slane %v433, %v470
        %v472 = vlaneseq
        %v473 = vshrl.u32 %v472, 7
        %v474 = vsub.s32 4, %v473
        %v475 = vrot.slane %v433, %v474
        %vm478 = vcmask 1040384
        %v479 = vsel %vm478, %v438, %v449
        %v480 = vsel %vm478, %v442, %v453
        %vm481 = vcmask 1041408
        %v482 = vsel %vm481, %v479, %v460
        %v483 = vsel %vm481, %v480, %v464
        %vm484 = vcmask 1042432
        %v485 = vsel %vm484, %v482, %v471
        %v486 = vsel %vm484, %v483, %v475
        %v489 = vcombine.low %v485, %v486
        %491 = vst [vmem:[%s284] sm:$0xff] %v489
        %v492 = vmul.f32 %v343, %v343
        %v493 = vadd.f32 %v343, %v373
        %v494 = vmul.f32 %v373, %v373
        %v495 = vadd.f32 %v492, %v494
        %v496 = vadd.f32 %v493, %v403
        %v497 = vmul.f32 %v403, %v403
        %v498 = vadd.f32 %v495, %v497
        %v499 = vadd.f32 %v496, %v433
        %v500 = vmul.f32 %v433, %v433
        %v501 = vadd.f32 %v498, %v500
        %v502 = vld [vmem:[#allocation2] sm:$0x3]
        %v505 = vunpack.c.l.s4 1966171168
        %v506 = vunpack.c.0.s8 %v505
        %v507 = vlaneseq
        %v508 = vshrl.u32 %v507, 7
        %v509 = vsub.s32 %v506, %v508
        %v510 = vrot.slane %v499, %v509
        %v512 = vunpack.c.l.s4 1966171168
        %v513 = vunpack.c.0.s8 %v512
        %v514 = vlaneseq
        %v515 = vshrl.u32 %v514, 7
        %v516 = vsub.s32 %v513, %v515
        %v517 = vrot.slane %v510, %v516
        %v519 = vadd.f32 %v502, %v517
        %v520 = vlaneseq
        %vm521 = vcmp.ge.s32.totalorder %v520, 0
        %vm522 = vcmp.lt.s32.totalorder %v520, 256
        %vm523 = vmand %vm521, %vm522
        %524 = vst.msk [vmem:[#allocation2] sm:$0x3] %vm523, %v519
        %v525 = vld [vmem:[#allocation3] sm:$0x3]
        %v528 = vunpack.c.l.s4 1966171168
        %v529 = vunpack.c.0.s8 %v528
        %v530 = vlaneseq
        %v531 = vshrl.u32 %v530, 7
        %v532 = vsub.s32 %v529, %v531
        %v533 = vrot.slane %v501, %v532
        %v535 = vunpack.c.l.s4 1966171168
        %v536 = vunpack.c.0.s8 %v535
        %v537 = vlaneseq
        %v538 = vshrl.u32 %v537, 7
        %v539 = vsub.s32 %v536, %v538
        %v540 = vrot.slane %v533, %v539
        %v542 = vadd.f32 %v525, %v540
        %543 = vst.msk [vmem:[#allocation3] sm:$0x3] %vm523, %v542
        // Predicated region
        $region49: #{tpu_custom_call.1} parent=31 // pred_check
          %p544 = pneg %p303
        $region50: #{tpu_custom_call.1} parent=31 // pred_check_branch
          %546 = sbr.rel (%p544) target = $region52
        $region51: #{tpu_custom_call.1} parent=31 // pred_region
          %v547 = vld [vmem:[#allocation2] sm:$0x3]
          %v549 = vlaneseq
          %v550 = vshrl.u32 %v549, 7
          %v551 = vsub.s32 0, %v550
          %v552 = vrot.slane %v547, %v551
          %v553 = vlaneseq
          %v554 = vshrl.u32 %v553, 7
          %v555 = vsub.s32 1, %v554
          %v556 = vrot.slane %v547, %v555
          %v559 = vsel %vm478, %v552, 0.0
          %v560 = vsel %vm478, %v556, 0.0
          %v561 = vadd.f32 %v559, %v560
          %562 = vadd.xlane.f32.xlu0 %v561
          %v563 = vpop.xlane.xlu0 %562
          %v564 = vmul.f32 %v563, 0.0009765625
          %v565 = vmul.f32 %v564, %v564
          %v566 = vadd.f32 %v565, 0.0
          %vm567 = vcmask 0
          %568 = vst.msk [vmem:[%s299] sm:$0x1] %vm567, %v566
          %v569 = vld [vmem:[#allocation3] sm:$0x3]
          %v571 = vlaneseq
          %v572 = vshrl.u32 %v571, 7
          %v573 = vsub.s32 0, %v572
          %v574 = vrot.slane %v569, %v573
          %v575 = vlaneseq
          %v576 = vshrl.u32 %v575, 7
          %v577 = vsub.s32 1, %v576
          %v578 = vrot.slane %v569, %v577
          %v581 = vsel %vm478, %v574, 0.0
          %v582 = vsel %vm478, %v578, 0.0
          %v583 = vadd.f32 %v581, %v582
          %584 = vadd.xlane.f32.xlu0 %v583
          %v585 = vpop.xlane.xlu0 %584
          %v586 = vadd.f32 %v585, 0.0
          %587 = vst.msk [vmem:[%s302] sm:$0x1] %vm567, %v586
        $region52: #{tpu_custom_call.1} parent=31 // pred_fallthru
          _
        %s588 = sand.u32 %s117, 1
        %s589 = scalar_lea.sflag [#allocation6], %s588
        %s590 = sand.u32 %s117, 1
        %s591 = smul.addr %s590, 8
        %s592 = scalar_lea.vmem [#allocation11], %s591
        %p593 = scmp.lt.s32.totalorder %s29, 1
        %s594 = scalar_select %p593, %s29, 1
        %s595 = scalar_lea.vmem %s4, %s594
        %p596 = scmp.lt.s32.totalorder %s29, 1
        %s597 = scalar_select %p596, %s29, 1
        %s598 = scalar_lea.vmem %s5, %s597
        // Predicated region
        $region53: #{tpu_custom_call.1} parent=31 // pred_check
          %p599 = pneg %p127
        $region54: #{tpu_custom_call.1} parent=31 // pred_check_branch
          %601 = sbr.rel (%p599) target = $region56
        $region55: #{tpu_custom_call.1} parent=31 // pred_region
          %s602 = smul.u32 2, %s30
          %s604 = ssub.s32 128, 128
          %605 = vsyncadd %s589, %s604
          %s606 = smul.addr %s29, 2
          %s607 = sadd.s32 %s602, %s606
          %s608 = smul.addr %s607, 64
          %s609 = scalar_lea.hbm %s3, %s608
          %s611 = sshll.u32 %s592, 4
          %s612 = int_to_ptr.vmem [resolvable:$true] %s611
          %614 = dma.vmem_to_hbm [thread:$0]  %s612, 128, %s609, %s589
        $region56: #{tpu_custom_call.1} parent=31 // pred_fallthru
          _
        // Predicated region
        $region57: #{tpu_custom_call.1} parent=31 // pred_check
          %p615 = pneg %p153
        $region58: #{tpu_custom_call.1} parent=31 // pred_check_branch
          %617 = sbr.rel (%p615) target = $region60
        $region59: #{tpu_custom_call.1} parent=31 // pred_region
          _
        $region60: #{tpu_custom_call.1} parent=31 // pred_fallthru
          _
        // Predicated region
        $region61: #{tpu_custom_call.1} parent=31 // pred_check
          %p618 = pneg %p179
        $region62: #{tpu_custom_call.1} parent=31 // pred_check_branch
          %620 = sbr.rel (%p618) target = $region64
        $region63: #{tpu_custom_call.1} parent=31 // pred_region
          _
        $region64: #{tpu_custom_call.1} parent=31 // pred_fallthru
          _
      $region32: #{tpu_custom_call.1} parent=5 // pred_fallthru
        _
      %p621 = scmp.le.s32.totalorder 2, %s20
      // Predicated region
      $region65: #{tpu_custom_call.1} parent=5 // pred_check
        %p622 = pneg %p621
      $region66: #{tpu_custom_call.1} parent=5 // pred_check_branch
        %624 = sbr.rel (%p622) target = $region68
      $region67: #{tpu_custom_call.1} parent=5 // pred_region
        %s625 = ssub.s32 %s20, 2
        // Predicated region
        $region69: #{tpu_custom_call.1} parent=67 // pred_check
          %p626 = pneg %p133
        $region70: #{tpu_custom_call.1} parent=67 // pred_check_branch
          %628 = sbr.rel (%p626) target = $region72
        $region71: #{tpu_custom_call.1} parent=67 // pred_region
          %s629 = sand.u32 %s118, 1
          %s630 = scalar_lea.sflag [#allocation6], %s629
          %s631 = sand.u32 %s118, 1
          %s632 = smul.addr %s631, 8
          %s633 = scalar_lea.vmem [#allocation11], %s632
          %634 = dma.done %s630, 128
        $region72: #{tpu_custom_call.1} parent=67 // pred_fallthru
          _
        // Predicated region
        $region73: #{tpu_custom_call.1} parent=67 // pred_check
          %p635 = pneg %p159
        $region74: #{tpu_custom_call.1} parent=67 // pred_check_branch
          %637 = sbr.rel (%p635) target = $region76
        $region75: #{tpu_custom_call.1} parent=67 // pred_region
          %p638 = scmp.lt.s32.totalorder %s31, 1
          %s639 = scalar_select %p638, %s31, 1
          %s640 = scalar_lea.vmem %s4, %s639
        $region76: #{tpu_custom_call.1} parent=67 // pred_fallthru
          _
        // Predicated region
        $region77: #{tpu_custom_call.1} parent=67 // pred_check
          %p641 = pneg %p185
        $region78: #{tpu_custom_call.1} parent=67 // pred_check_branch
          %643 = sbr.rel (%p641) target = $region80
        $region79: #{tpu_custom_call.1} parent=67 // pred_region
          %p644 = scmp.lt.s32.totalorder %s31, 1
          %s645 = scalar_select %p644, %s31, 1
          %s646 = scalar_lea.vmem %s5, %s645
        $region80: #{tpu_custom_call.1} parent=67 // pred_fallthru
          _
      $region68: #{tpu_custom_call.1} parent=5 // pred_fallthru
        _
    $region6: #{tpu_custom_call.1} parent=1 // loop_footer
      %s24 = sadd.s32 1, %s20
    $region7: #{tpu_custom_call.1} parent=1 // loop_footer_branch
      %19 = sbr.rel target = $region3
    $region8: #{tpu_custom_call.1} parent=1 // loop_exit
      _
    %647 = vsyncpa [#allocation5], 1
    %s648 = scalar_lea.sflag [#allocation5], 1
    %649 = vsyncpa %s648, 1
    %650 = vsyncpa [#allocation6], 1
    %s651 = scalar_lea.sflag [#allocation6], 1
    %652 = vsyncpa %s651, 1
    %653 = vsyncpa [#allocation7], 1
    %s654 = scalar_lea.sflag [#allocation7], 1
    %655 = vsyncpa %s654, 1
    %656 = vsyncpa [#allocation8], 1
    %s657 = scalar_lea.sflag [#allocation8], 1
    %658 = vsyncpa %s657, 1

</llo_original>
